<compile_context>
chip_gen: v6e
topology: v6e:2x2x1
jax: 0.10.0
libtpu: 0.0.40
codegen_flags: <defaults>
</compile_context>

<pallas_src>
import math
from functools import partial

import jax
import jax.numpy as jnp
import numpy as np
from jax import lax
from jax.experimental import pallas as pl
from jax.experimental.pallas import tpu as pltpu

_MXU_DTYPE = jnp.bfloat16  # feed the MXU bf16, accumulate f32


def _tpu_generation():
    """Best-effort TPU generation from device_kind ('TPU v5 lite' -> 5). 0 = unknown."""
    try:
        kind = jax.devices()[0].device_kind.lower()
    except Exception:
        return 0
    for gen in range(9, 1, -1):
        if f"v{gen}" in kind or f"tpu{gen}" in kind:
            return gen
    return 0


_GEN = _tpu_generation()
_BIG_VMEM = _GEN in (5, 6)  # 128-MiB VMEM parts -> larger scoped budget / tiles
# v7x has only 64 MiB physical VMEM: keep the conservative cap there / on unknown parts.
_VMEM_LIMIT_BYTES = (96 if _BIG_VMEM else 32) * 1024 * 1024
# bf16 exp uses the bf16 EUP on v6e+/v7x (~2x exp throughput, no extra cast for the
# PV matmul); keep f32 exp on <=v5 which has no bf16 EUP.
_EXP_DTYPE = jnp.float32 if (0 < _GEN <= 5) else _MXU_DTYPE


def _pick_tile(dim, target):
    """Largest tile <= target that divides `dim` and is a multiple of 128.

    Falls back to the full dim (always a legal block) when nothing divides.
    TODO(synk): for sequence lengths with no 128-multiple factor (e.g. N=197),
    switch to pl.cdiv grids + in-kernel masking instead of whole-dim blocks.
    """
    t = target
    while t >= 128:
        if dim >= t and dim % t == 0:
            return t
        t //= 2
    return dim


# ----------------------------------------------------------------------------
# Kernel 1: QKV projection fused with head split, normalization, logit scale.
# ----------------------------------------------------------------------------

def _qkv_heads_kernel(scale_ref, x_ref, w_ref, q_ref, k_ref, v_ref, y_ref):
    # scale_ref: (H,) f32 in SMEM  (exp(clamp(scale)) per head)
    # x_ref: (TM, C) f32, w_ref: (C, 3*H*D) bf16
    # q_ref/k_ref/v_ref: (H, TM, D) bf16 output blocks (head-major layout)
    # y_ref: (TM, 3*H*D) f32 VMEM scratch staging the projection result
    H, _, D = q_ref.shape

    x = x_ref[...].astype(_MXU_DTYPE)
    # Stage y in VMEM: per-head column slices are then read from the ref instead
    # of slicing a ~1 MiB live register value (removes spill pressure + per-slice
    # XLU relayouts on the value).
    y_ref[...] = jnp.dot(x, w_ref[...], preferred_element_type=jnp.float32)

    eps2 = 1e-24  # (F.normalize eps = 1e-12) ** 2
    for h in range(H):  # static loop over heads
        qh = y_ref[:, h * D:(h + 1) * D]
        kh = y_ref[:, (H + h) * D:(H + h + 1) * D]
        vh = y_ref[:, (2 * H + h) * D:(2 * H + h + 1) * D]
        # rsqrt (EUP) instead of sqrt + divide (VPU); normalization stays in f32.
        qn = qh * lax.rsqrt(jnp.maximum(jnp.sum(qh * qh, axis=-1, keepdims=True), eps2))
        kn = kh * lax.rsqrt(jnp.maximum(jnp.sum(kh * kh, axis=-1, keepdims=True), eps2))
        # Fold the per-head logit scale into q (N*D multiply instead of N*N).
        q_ref[h] = (qn * scale_ref[h]).astype(q_ref.dtype)
        k_ref[h] = kn.astype(k_ref.dtype)
        v_ref[h] = vh.astype(v_ref.dtype)
    # TODO(synk): when D < 128 these per-head stores are lane-masked; padding D
    # to 128 (or emitting a lane-dense (B,N,H*D) layout) would avoid vst.msk.


def pallas_qkv_heads(x, qkv_w_t_bf16, logit_scale, num_heads, head_dim):
    """x: (B,N,C) f32; qkv_w_t_bf16: (C, 3*H*D) bf16; logit_scale: (H,) f32.

    Returns q_scaled_normalized, k_normalized, v — each (B, H, N, D) bf16.
    """
    B, N, C = x.shape
    H, D = num_heads, head_dim
    TM = _pick_tile(N, 128)
    grid = (B, N // TM)

    # The weight block never changes across the grid, so double-buffering it is
    # pure VMEM waste; single-buffer it once it is big enough to matter (real C).
    w_kwargs = {}
    if qkv_w_t_bf16.size * qkv_w_t_bf16.dtype.itemsize >= (2 << 20):
        w_kwargs["pipeline_mode"] = pl.Buffered(1)
    w_spec = pl.BlockSpec((C, 3 * H * D), lambda b, m: (0, 0), **w_kwargs)

    out_sd = jax.ShapeDtypeStruct((B, H, N, D), _MXU_DTYPE)
    head_spec = pl.BlockSpec((None, H, TM, D), lambda b, m: (b, 0, m, 0))

    return pl.pallas_call(
        _qkv_heads_kernel,
        out_shape=(out_sd, out_sd, out_sd),
        grid=grid,
        in_specs=[
            pl.BlockSpec(memory_space=pltpu.SMEM),                # logit_scale (H,)
            pl.BlockSpec((None, TM, C), lambda b, m: (b, m, 0)),  # x rows
            w_spec,                                               # resident weight
        ],
        out_specs=(head_spec, head_spec, head_spec),
        scratch_shapes=[pltpu.VMEM((TM, 3 * H * D), jnp.float32)],
        compiler_params=pltpu.CompilerParams(
            dimension_semantics=("parallel", "parallel"),
            vmem_limit_bytes=_VMEM_LIMIT_BYTES),
    )(logit_scale, x, qkv_w_t_bf16)


# ----------------------------------------------------------------------------
# Kernel 2: flash-style cosine attention (online softmax over KV tiles).
# ----------------------------------------------------------------------------

def _flash_cos_attn_kernel(q_ref, k_ref, v_ref, o_ref, m_sc, l_sc, acc_sc,
                           *, head_group, exp_dtype):
    # q_ref: (H, TQ, D) bf16 (already normalized * logit_scale)
    # k_ref/v_ref: (H, TKV, D) bf16
    # o_ref: (TQ, H*D)  — lane-dense output block in (B, N, H*D) layout
    # scratch: m_sc/l_sc (H, TQ, 1) f32, acc_sc (H, TQ, D) f32
    ki = pl.program_id(1)
    H = q_ref.shape[0]

    @pl.when(ki == 0)
    def _():
        m_sc[...] = jnp.full(m_sc.shape, -jnp.inf, m_sc.dtype)
        l_sc[...] = jnp.zeros(l_sc.shape, l_sc.dtype)
        acc_sc[...] = jnp.zeros(acc_sc.shape, acc_sc.dtype)

    def body(g, carry):
        hs = pl.ds(g * head_group, head_group)
        q = q_ref[hs]                                     # (G, TQ, D) bf16
        k = k_ref[hs]                                     # (G, TKV, D) bf16
        # s[h,q,kv] = sum_d q*k — contract last dims, no K^T materialized.
        s = lax.dot_general(q, k, (((2,), (2,)), ((0,), (0,))),
                            preferred_element_type=jnp.float32)   # (G, TQ, TKV) f32
        m_prev = m_sc[hs]
        m_new = jnp.maximum(m_prev, jnp.max(s, axis=-1, keepdims=True))
        alpha = jnp.exp(m_prev - m_new)                   # f32 bookkeeping
        # exp in bf16 on v6e+/v7x (EUP is the saturated slot there); f32 on <=v5.
        p = jnp.exp((s - m_new).astype(exp_dtype))
        l_sc[hs] = alpha * l_sc[hs] + jnp.sum(p.astype(jnp.float32),
                                              axis=-1, keepdims=True)
        pv = lax.dot_general(p.astype(v_ref.dtype), v_ref[hs],
                             (((2,), (1,)), ((0,), (0,))),
                             preferred_element_type=jnp.float32)  # (G, TQ, D) f32
        acc_sc[hs] = alpha * acc_sc[hs] + pv
        m_sc[hs] = m_new
        return carry

    # Rolled loop over head groups bounds the live (G, TQ, TKV) score/prob set
    # so it fits the 64-vreg file instead of spilling all heads at once.
    lax.fori_loop(0, H // head_group, body, 0, unroll=False)

    # attn_drop is identity here (p=0.0 / eval mode).
    @pl.when(ki == pl.num_programs(1) - 1)
    def _():
        # approx reciprocal (EUP) is within the bf16 error budget; switch to
        # approx=False if the tolerance is ever tightened.
        o = acc_sc[...] * pl.reciprocal(l_sc[...], approx=True)   # (H, TQ, D) f32
        # Pack heads along lanes -> one dense (TQ, H*D) store in (B, N, H*D) layout.
        o_ref[...] = jnp.concatenate([o[h] for h in range(H)], axis=-1).astype(o_ref.dtype)


def _pick_head_group(num_heads, tq, tkv):
    # Keep the live per-group s (f32) + p working set around <= 192 KiB (~48 vregs).
    budget = 192 * 1024
    per_head = tq * tkv * 6
    g = max(1, min(num_heads, budget // max(per_head, 1)))
    while num_heads % g:
        g -= 1
    return g


def pallas_flash_cos_attention(qn, kn, v):
    """qn,kn,v: (B, H, N, D) bf16 -> (B, N, H*D) bf16."""
    B, H, N, D = qn.shape
    TQ = _pick_tile(N, 128)
    # TKV kept at 256 (not 512): one head group's (TQ, TKV) score tile must stay
    # near the vreg file; depth of pipelining, not tile size, hides the DMA.
    TKV = _pick_tile(N, 256)
    nq, nkv = N // TQ, N // TKV
    head_group = _pick_head_group(H, TQ, TKV)

    # Fold batch and q-tile axes into one parallel axis so small B still feeds
    # both TensorCores on v7x; KV (reduction) axis stays last and "arbitrary".
    grid = (B * nq, nkv)

    q_spec = pl.BlockSpec((None, H, TQ, D), lambda t, ki: (t // nq, 0, t % nq, 0))
    # TODO(synk): add pipeline_mode=pl.Buffered(3) on k/v if profiling shows exposed DMA.
    kv_spec = pl.BlockSpec((None, H, TKV, D), lambda t, ki: (t // nq, 0, ki, 0))
    o_spec = pl.BlockSpec((None, TQ, H * D), lambda t, ki: (t // nq, t % nq, 0))

    return pl.pallas_call(
        partial(_flash_cos_attn_kernel, head_group=head_group, exp_dtype=_EXP_DTYPE),
        out_shape=jax.ShapeDtypeStruct((B, N, H * D), _MXU_DTYPE),
        grid=grid,
        in_specs=[q_spec, kv_spec, kv_spec],
        out_specs=o_spec,
        scratch_shapes=[
            pltpu.VMEM((H, TQ, 1), jnp.float32),   # running max m
            pltpu.VMEM((H, TQ, 1), jnp.float32),   # running sum l
            pltpu.VMEM((H, TQ, D), jnp.float32),   # output accumulator
        ],
        compiler_params=pltpu.CompilerParams(
            dimension_semantics=("parallel", "arbitrary"),
            vmem_limit_bytes=_VMEM_LIMIT_BYTES),
    )(qn, kn, v)


# ----------------------------------------------------------------------------
# Kernel 3: tiled matmul + bias (output projection).
# ----------------------------------------------------------------------------

def _matmul_bias_kernel(x_ref, w_ref, b_ref, o_ref):
    # Single-K-block path: no reduction grid axis, no accumulator scratch.
    acc = jnp.dot(x_ref[...].astype(_MXU_DTYPE), w_ref[...],
                  preferred_element_type=jnp.float32)
    o_ref[...] = (acc + b_ref[...]).astype(o_ref.dtype)


def _matmul_bias_acc_kernel(x_ref, w_ref, b_ref, o_ref, acc_ref):
    ki = pl.program_id(2)

    @pl.when(ki == 0)
    def _():
        acc_ref[...] = jnp.zeros(acc_ref.shape, acc_ref.dtype)

    acc_ref[...] += jnp.dot(x_ref[...].astype(_MXU_DTYPE), w_ref[...],
                            preferred_element_type=jnp.float32)

    @pl.when(ki == pl.num_programs(2) - 1)
    def _():
        o_ref[...] = (acc_ref[...] + b_ref[...]).astype(o_ref.dtype)


def pallas_linear(x2, w_t_bf16, b_row_f32, out_dtype):
    """x2: (M, K) f32; w_t_bf16: (K, Nout) bf16; b_row_f32: (1, Nout) f32."""
    M, K = x2.shape
    Nout = w_t_bf16.shape[1]
    mt_target = 512 if _BIG_VMEM else 256
    TM = _pick_tile(M, mt_target)
    TN = _pick_tile(Nout, mt_target)
    # TODO(synk): on v7x the bf16 weight could be fp8-quantized (per-channel
    # scales folded into the bias) for ~2x MXU throughput on this GEMM.

    if K <= 1024:
        # Common ViT-sized projection: whole K in one block -> 2-D grid, no f32
        # accumulator read-modify-write, no init/finalize pl.when.
        grid = (M // TM, Nout // TN)
        return pl.pallas_call(
            _matmul_bias_kernel,
            out_shape=jax.ShapeDtypeStruct((M, Nout), out_dtype),
            grid=grid,
            in_specs=[
                pl.BlockSpec((TM, K), lambda mi, ni: (mi, 0)),
                pl.BlockSpec((K, TN), lambda mi, ni: (0, ni)),
                pl.BlockSpec((1, TN), lambda mi, ni: (0, ni)),
            ],
            out_specs=pl.BlockSpec((TM, TN), lambda mi, ni: (mi, ni)),
            compiler_params=pltpu.CompilerParams(
                dimension_semantics=("parallel", "parallel"),
                vmem_limit_bytes=_VMEM_LIMIT_BYTES),
        )(x2, w_t_bf16, b_row_f32)

    TK = _pick_tile(K, 512)
    grid = (M // TM, Nout // TN, K // TK)
    return pl.pallas_call(
        _matmul_bias_acc_kernel,
        out_shape=jax.ShapeDtypeStruct((M, Nout), out_dtype),
        grid=grid,
        in_specs=[
            pl.BlockSpec((TM, TK), lambda mi, ni, ki: (mi, ki)),
            pl.BlockSpec((TK, TN), lambda mi, ni, ki: (ki, ni)),
            pl.BlockSpec((1, TN), lambda mi, ni, ki: (0, ni)),
        ],
        out_specs=pl.BlockSpec((TM, TN), lambda mi, ni, ki: (mi, ni)),
        scratch_shapes=[pltpu.VMEM((TM, TN), jnp.float32)],
        compiler_params=pltpu.CompilerParams(
            dimension_semantics=("parallel", "parallel", "arbitrary"),
            vmem_limit_bytes=_VMEM_LIMIT_BYTES),
    )(x2, w_t_bf16, b_row_f32)


# ----------------------------------------------------------------------------
# Parameter preparation (one-time) + full forward
# ----------------------------------------------------------------------------

def prepare_cos_attention_params(params, num_heads):
    """One-time prep: weight transposes / bf16 casts / logit scale, hoisted out
    of the per-call forward path (each forward no longer re-reads and rewrites
    both weight matrices in HBM)."""
    qkv_w = params["qkv_w"]        # (3*H*D, C)
    proj_w = params["proj_w"]      # (C, H*D)
    proj_b = params["proj_b"]      # (C,)
    scale = params["scale"]        # (H, 1, 1)
    H = num_heads
    D = qkv_w.shape[0] // (3 * H)
    # exp(clamp(scale, max=ln(100)))
    logit_scale = jnp.exp(jnp.minimum(scale, 4.6052)).reshape(H).astype(jnp.float32)
    return {
        "qkv_w_t": qkv_w.T.astype(_MXU_DTYPE),                # (C, 3*H*D) bf16
        "proj_w_t": proj_w.T.astype(_MXU_DTYPE),               # (H*D, C)   bf16
        "proj_b_row": proj_b.astype(jnp.float32).reshape(1, -1),
        "logit_scale": logit_scale,
        "num_heads": H,
        "head_dim": D,
    }


def cos_attention_forward(x, prepared):
    B, N, C = x.shape
    H = prepared["num_heads"]
    D = prepared["head_dim"]

    # TODO(synk): qkv_bias=True path (q_bias/v_bias) not implemented; module default is False.
    qn, kn, v = pallas_qkv_heads(x, prepared["qkv_w_t"], prepared["logit_scale"], H, D)

    attn_out = pallas_flash_cos_attention(qn, kn, v)           # (B, N, H*D) bf16

    out = pallas_linear(attn_out.reshape(B * N, H * D), prepared["proj_w_t"],
                        prepared["proj_b_row"], out_dtype=x.dtype)   # (B*N, C)
    # proj_drop is identity (p=0.0 / eval mode).
    return out.reshape(B, N, C)


# ----------------------------------------------------------------------------
# Pure-JAX f32 reference (PyTorch semantics)
# ----------------------------------------------------------------------------

def cos_attention_reference(x, params, num_heads):
    B, N, C = x.shape
    qkv = x @ params["qkv_w"].T
    head_dim = qkv.shape[-1] // 3 // num_heads
    qkv = qkv.reshape(B, N, 3, num_heads, head_dim).transpose(2, 0, 3, 1, 4)
    q, k, v = qkv[0], qkv[1], qkv[2]
    eps = 1e-12
    qn = q / jnp.maximum(jnp.linalg.norm(q, axis=-1, keepdims=True), eps)
    kn = k / jnp.maximum(jnp.linalg.norm(k, axis=-1, keepdims=True), eps)
    attn = jnp.einsum("bhnd,bhmd->bhnm", qn, kn)
    logit_scale = jnp.exp(jnp.minimum(params["scale"], 4.6052))  # (H,1,1)
    attn = attn * logit_scale[None]
    attn = jax.nn.softmax(attn, axis=-1)
    out = jnp.einsum("bhnm,bhmd->bhnd", attn, v)
    out = out.transpose(0, 2, 1, 3).reshape(B, N, -1)
    return out @ params["proj_w"].T + params["proj_b"]


# ----------------------------------------------------------------------------
# main
# ----------------------------------------------------------------------------

if __name__ == "__main__":
    B, N, C = 2, 16, 32
    num_heads = 4
    head_dim = C // num_heads
    all_head_dim = head_dim * num_heads

    key = jax.random.PRNGKey(0)
    kx, kqkv, kpw, kpb = jax.random.split(key, 4)

    x = jax.random.normal(kx, (B, N, C), dtype=jnp.float32)

    bound_qkv = 1.0 / math.sqrt(C)
    bound_proj = 1.0 / math.sqrt(all_head_dim)
    params = {
        "qkv_w": jax.random.uniform(kqkv, (3 * all_head_dim, C), jnp.float32,
                                    -bound_qkv, bound_qkv),
        "proj_w": jax.random.uniform(kpw, (C, all_head_dim), jnp.float32,
                                     -bound_proj, bound_proj),
        "proj_b": jax.random.uniform(kpb, (C,), jnp.float32,
                                     -bound_proj, bound_proj),
        "scale": jnp.log(10.0 * jnp.ones((num_heads, 1, 1), jnp.float32)),
    }

    prepared = prepare_cos_attention_params(params, num_heads)

    out = cos_attention_forward(x, prepared)
    out = jax.block_until_ready(out)

    ref = cos_attention_reference(x, params, num_heads)
    # bf16 MXU inputs / bf16 exp (f32 accumulation) -> loosened tolerance vs f32 ref.
    np.testing.assert_allclose(np.asarray(out), np.asarray(ref), rtol=5e-2, atol=5e-2)

    print("KERNEL_OK")
</pallas_src>

<mosaic_0001>
module attributes {stable_mosaic.version = 11 : i64} {
  func.func @_qkv_heads_kernel(%arg0: i32, %arg1: i32, %arg2: memref<4xf32, #tpu.memory_space<smem>>, %arg3: memref<1x16x32xf32, #tpu.memory_space<vmem>>, %arg4: memref<32x96xbf16, #tpu.memory_space<vmem>>, %arg5: memref<1x4x16x8xbf16, #tpu.memory_space<vmem>>, %arg6: memref<1x4x16x8xbf16, #tpu.memory_space<vmem>>, %arg7: memref<1x4x16x8xbf16, #tpu.memory_space<vmem>>, %arg8: memref<16x96xf32, #tpu.memory_space<vmem>>) attributes {dimension_semantics = [#tpu.dimension_semantics<parallel>, #tpu.dimension_semantics<parallel>], iteration_bounds = array<i64: 2, 1>, scalar_prefetch = 0 : i64, scratch_operands = 1 : i64, tpu.core_type = #tpu.core_type<tc>, window_params = [{transform_indices = @transform_0, window_bounds = array<i64: 4>}, {transform_indices = @transform_1, window_bounds = array<i64: 1, 16, 32>}, {pipeline_mode = #tpu.pipeline_mode<synchronous>, transform_indices = @transform_2, window_bounds = array<i64: 32, 96>}, {transform_indices = @transform_3, window_bounds = array<i64: 1, 4, 16, 8>}, {transform_indices = @transform_4, window_bounds = array<i64: 1, 4, 16, 8>}, {transform_indices = @transform_5, window_bounds = array<i64: 1, 4, 16, 8>}]} {
    %c0 = arith.constant 0 : index
    %c0_0 = arith.constant 0 : index
    %c0_1 = arith.constant 0 : index
    %0 = vector.load %arg3[%c0, %c0_0, %c0_1] : memref<1x16x32xf32, #tpu.memory_space<vmem>>, vector<1x16x32xf32>
    %1 = vector.shape_cast %0 : vector<1x16x32xf32> to vector<16x32xf32>
    %2 = arith.truncf %1 : vector<16x32xf32> to vector<16x32xbf16>
    %c0_2 = arith.constant 0 : index
    %c0_3 = arith.constant 0 : index
    %3 = vector.load %arg4[%c0_2, %c0_3] : memref<32x96xbf16, #tpu.memory_space<vmem>>, vector<32x96xbf16>
    %cst = arith.constant dense<0.000000e+00> : vector<16x96xf32>
    %4 = tpu.matmul %2, %3, %cst {dimension_numbers = #tpu.dot_dimension_numbers<[1], [0], [0], [1], [0, 0, 1, 1], [], []>} : vector<16x32xbf16>, vector<32x96xbf16>, vector<16x96xf32> -> vector<16x96xf32>
    %c0_4 = arith.constant 0 : index
    %c0_5 = arith.constant 0 : index
    %5 = vector.load %arg8[%c0_4, %c0_5] : memref<16x96xf32, #tpu.memory_space<vmem>>, vector<16x96xf32>
    tpu.vector_store %arg8[%c0_4, %c0_5], %4 {strides = array<i32>} : memref<16x96xf32, #tpu.memory_space<vmem>>, vector<16x96xf32>,
    %c0_6 = arith.constant 0 : index
    %c0_7 = arith.constant 0 : index
    %6 = vector.load %arg8[%c0_6, %c0_7] : memref<16x96xf32, #tpu.memory_space<vmem>>, vector<16x8xf32>
    %c0_8 = arith.constant 0 : index
    %c32 = arith.constant 32 : index
    %7 = vector.load %arg8[%c0_8, %c32] : memref<16x96xf32, #tpu.memory_space<vmem>>, vector<16x8xf32>
    %c0_9 = arith.constant 0 : index
    %c64 = arith.constant 64 : index
    %8 = vector.load %arg8[%c0_9, %c64] : memref<16x96xf32, #tpu.memory_space<vmem>>, vector<16x8xf32>
    %9 = arith.mulf %6, %6 : vector<16x8xf32>
    %cst_10 = arith.constant dense<0.000000e+00> : vector<16xf32>
    %10 = vector.multi_reduction <add>, %9, %cst_10 [1] : vector<16x8xf32> to vector<16xf32>
    %11 = vector.shape_cast %10 : vector<16xf32> to vector<16x1xf32>
    %cst_11 = arith.constant 1.000000e-24 : f32
    %12 = vector.broadcast %cst_11 : f32 to vector<16x1xf32>
    %13 = arith.maximumf %11, %12 : vector<16x1xf32>
    %14 = math.rsqrt %13 : vector<16x1xf32>
    %15 = vector.broadcast %14 : vector<16x1xf32> to vector<16x8xf32>
    %16 = arith.mulf %6, %15 : vector<16x8xf32>
    %17 = arith.mulf %7, %7 : vector<16x8xf32>
    %cst_12 = arith.constant dense<0.000000e+00> : vector<16xf32>
    %18 = vector.multi_reduction <add>, %17, %cst_12 [1] : vector<16x8xf32> to vector<16xf32>
    %19 = vector.shape_cast %18 : vector<16xf32> to vector<16x1xf32>
    %cst_13 = arith.constant 1.000000e-24 : f32
    %20 = vector.broadcast %cst_13 : f32 to vector<16x1xf32>
    %21 = arith.maximumf %19, %20 : vector<16x1xf32>
    %22 = math.rsqrt %21 : vector<16x1xf32>
    %23 = vector.broadcast %22 : vector<16x1xf32> to vector<16x8xf32>
    %24 = arith.mulf %7, %23 : vector<16x8xf32>
    %c0_14 = arith.constant 0 : index
    %25 = memref.load %arg2[%c0_14] : memref<4xf32, #tpu.memory_space<smem>>
    %26 = vector.broadcast %25 : f32 to vector<16x8xf32>
    %27 = arith.mulf %16, %26 : vector<16x8xf32>
    %28 = arith.truncf %27 : vector<16x8xf32> to vector<16x8xbf16>
    %c0_15 = arith.constant 0 : index
    %c0_16 = arith.constant 0 : index
    %c0_17 = arith.constant 0 : index
    %c0_18 = arith.constant 0 : index
    %29 = vector.load %arg5[%c0_15, %c0_16, %c0_17, %c0_18] : memref<1x4x16x8xbf16, #tpu.memory_space<vmem>>, vector<1x1x16x8xbf16>
    %30 = vector.shape_cast %29 : vector<1x1x16x8xbf16> to vector<16x8xbf16>
    %31 = vector.shape_cast %28 : vector<16x8xbf16> to vector<1x1x16x8xbf16>
    tpu.vector_store %arg5[%c0_15, %c0_16, %c0_17, %c0_18], %31 {strides = array<i32>} : memref<1x4x16x8xbf16, #tpu.memory_space<vmem>>, vector<1x1x16x8xbf16>,
    %32 = arith.truncf %24 : vector<16x8xf32> to vector<16x8xbf16>
    %c0_19 = arith.constant 0 : index
    %c0_20 = arith.constant 0 : index
    %c0_21 = arith.constant 0 : index
    %c0_22 = arith.constant 0 : index
    %33 = vector.load %arg6[%c0_19, %c0_20, %c0_21, %c0_22] : memref<1x4x16x8xbf16, #tpu.memory_space<vmem>>, vector<1x1x16x8xbf16>
    %34 = vector.shape_cast %33 : vector<1x1x16x8xbf16> to vector<16x8xbf16>
    %35 = vector.shape_cast %32 : vector<16x8xbf16> to vector<1x1x16x8xbf16>
    tpu.vector_store %arg6[%c0_19, %c0_20, %c0_21, %c0_22], %35 {strides = array<i32>} : memref<1x4x16x8xbf16, #tpu.memory_space<vmem>>, vector<1x1x16x8xbf16>,
    %36 = arith.truncf %8 : vector<16x8xf32> to vector<16x8xbf16>
    %c0_23 = arith.constant 0 : index
    %c0_24 = arith.constant 0 : index
    %c0_25 = arith.constant 0 : index
    %c0_26 = arith.constant 0 : index
    %37 = vector.load %arg7[%c0_23, %c0_24, %c0_25, %c0_26] : memref<1x4x16x8xbf16, #tpu.memory_space<vmem>>, vector<1x1x16x8xbf16>
    %38 = vector.shape_cast %37 : vector<1x1x16x8xbf16> to vector<16x8xbf16>
    %39 = vector.shape_cast %36 : vector<16x8xbf16> to vector<1x1x16x8xbf16>
    tpu.vector_store %arg7[%c0_23, %c0_24, %c0_25, %c0_26], %39 {strides = array<i32>} : memref<1x4x16x8xbf16, #tpu.memory_space<vmem>>, vector<1x1x16x8xbf16>,
    %c0_27 = arith.constant 0 : index
    %c8 = arith.constant 8 : index
    %40 = vector.load %arg8[%c0_27, %c8] : memref<16x96xf32, #tpu.memory_space<vmem>>, vector<16x8xf32>
    %c0_28 = arith.constant 0 : index
    %c40 = arith.constant 40 : index
    %41 = vector.load %arg8[%c0_28, %c40] : memref<16x96xf32, #tpu.memory_space<vmem>>, vector<16x8xf32>
    %c0_29 = arith.constant 0 : index
    %c72 = arith.constant 72 : index
    %42 = vector.load %arg8[%c0_29, %c72] : memref<16x96xf32, #tpu.memory_space<vmem>>, vector<16x8xf32>
    %43 = arith.mulf %40, %40 : vector<16x8xf32>
    %cst_30 = arith.constant dense<0.000000e+00> : vector<16xf32>
    %44 = vector.multi_reduction <add>, %43, %cst_30 [1] : vector<16x8xf32> to vector<16xf32>
    %45 = vector.shape_cast %44 : vector<16xf32> to vector<16x1xf32>
    %cst_31 = arith.constant 1.000000e-24 : f32
    %46 = vector.broadcast %cst_31 : f32 to vector<16x1xf32>
    %47 = arith.maximumf %45, %46 : vector<16x1xf32>
    %48 = math.rsqrt %47 : vector<16x1xf32>
    %49 = vector.broadcast %48 : vector<16x1xf32> to vector<16x8xf32>
    %50 = arith.mulf %40, %49 : vector<16x8xf32>
    %51 = arith.mulf %41, %41 : vector<16x8xf32>
    %cst_32 = arith.constant dense<0.000000e+00> : vector<16xf32>
    %52 = vector.multi_reduction <add>, %51, %cst_32 [1] : vector<16x8xf32> to vector<16xf32>
    %53 = vector.shape_cast %52 : vector<16xf32> to vector<16x1xf32>
    %cst_33 = arith.constant 1.000000e-24 : f32
    %54 = vector.broadcast %cst_33 : f32 to vector<16x1xf32>
    %55 = arith.maximumf %53, %54 : vector<16x1xf32>
    %56 = math.rsqrt %55 : vector<16x1xf32>
    %57 = vector.broadcast %56 : vector<16x1xf32> to vector<16x8xf32>
    %58 = arith.mulf %41, %57 : vector<16x8xf32>
    %c1 = arith.constant 1 : index
    %59 = memref.load %arg2[%c1] : memref<4xf32, #tpu.memory_space<smem>>
    %60 = vector.broadcast %59 : f32 to vector<16x8xf32>
    %61 = arith.mulf %50, %60 : vector<16x8xf32>
    %62 = arith.truncf %61 : vector<16x8xf32> to vector<16x8xbf16>
    %c0_34 = arith.constant 0 : index
    %c1_35 = arith.constant 1 : index
    %c0_36 = arith.constant 0 : index
    %c0_37 = arith.constant 0 : index
    %63 = vector.load %arg5[%c0_34, %c1_35, %c0_36, %c0_37] : memref<1x4x16x8xbf16, #tpu.memory_space<vmem>>, vector<1x1x16x8xbf16>
    %64 = vector.shape_cast %63 : vector<1x1x16x8xbf16> to vector<16x8xbf16>
    %65 = vector.shape_cast %62 : vector<16x8xbf16> to vector<1x1x16x8xbf16>
    tpu.vector_store %arg5[%c0_34, %c1_35, %c0_36, %c0_37], %65 {strides = array<i32>} : memref<1x4x16x8xbf16, #tpu.memory_space<vmem>>, vector<1x1x16x8xbf16>,
    %66 = arith.truncf %58 : vector<16x8xf32> to vector<16x8xbf16>
    %c0_38 = arith.constant 0 : index
    %c1_39 = arith.constant 1 : index
    %c0_40 = arith.constant 0 : index
    %c0_41 = arith.constant 0 : index
    %67 = vector.load %arg6[%c0_38, %c1_39, %c0_40, %c0_41] : memref<1x4x16x8xbf16, #tpu.memory_space<vmem>>, vector<1x1x16x8xbf16>
    %68 = vector.shape_cast %67 : vector<1x1x16x8xbf16> to vector<16x8xbf16>
    %69 = vector.shape_cast %66 : vector<16x8xbf16> to vector<1x1x16x8xbf16>
    tpu.vector_store %arg6[%c0_38, %c1_39, %c0_40, %c0_41], %69 {strides = array<i32>} : memref<1x4x16x8xbf16, #tpu.memory_space<vmem>>, vector<1x1x16x8xbf16>,
    %70 = arith.truncf %42 : vector<16x8xf32> to vector<16x8xbf16>
    %c0_42 = arith.constant 0 : index
    %c1_43 = arith.constant 1 : index
    %c0_44 = arith.constant 0 : index
    %c0_45 = arith.constant 0 : index
    %71 = vector.load %arg7[%c0_42, %c1_43, %c0_44, %c0_45] : memref<1x4x16x8xbf16, #tpu.memory_space<vmem>>, vector<1x1x16x8xbf16>
    %72 = vector.shape_cast %71 : vector<1x1x16x8xbf16> to vector<16x8xbf16>
    %73 = vector.shape_cast %70 : vector<16x8xbf16> to vector<1x1x16x8xbf16>
    tpu.vector_store %arg7[%c0_42, %c1_43, %c0_44, %c0_45], %73 {strides = array<i32>} : memref<1x4x16x8xbf16, #tpu.memory_space<vmem>>, vector<1x1x16x8xbf16>,
    %c0_46 = arith.constant 0 : index
    %c16 = arith.constant 16 : index
    %74 = vector.load %arg8[%c0_46, %c16] : memref<16x96xf32, #tpu.memory_space<vmem>>, vector<16x8xf32>
    %c0_47 = arith.constant 0 : index
    %c48 = arith.constant 48 : index
    %75 = vector.load %arg8[%c0_47, %c48] : memref<16x96xf32, #tpu.memory_space<vmem>>, vector<16x8xf32>
    %c0_48 = arith.constant 0 : index
    %c80 = arith.constant 80 : index
    %76 = vector.load %arg8[%c0_48, %c80] : memref<16x96xf32, #tpu.memory_space<vmem>>, vector<16x8xf32>
    %77 = arith.mulf %74, %74 : vector<16x8xf32>
    %cst_49 = arith.constant dense<0.000000e+00> : vector<16xf32>
    %78 = vector.multi_reduction <add>, %77, %cst_49 [1] : vector<16x8xf32> to vector<16xf32>
    %79 = vector.shape_cast %78 : vector<16xf32> to vector<16x1xf32>
    %cst_50 = arith.constant 1.000000e-24 : f32
    %80 = vector.broadcast %cst_50 : f32 to vector<16x1xf32>
    %81 = arith.maximumf %79, %80 : vector<16x1xf32>
    %82 = math.rsqrt %81 : vector<16x1xf32>
    %83 = vector.broadcast %82 : vector<16x1xf32> to vector<16x8xf32>
    %84 = arith.mulf %74, %83 : vector<16x8xf32>
    %85 = arith.mulf %75, %75 : vector<16x8xf32>
    %cst_51 = arith.constant dense<0.000000e+00> : vector<16xf32>
    %86 = vector.multi_reduction <add>, %85, %cst_51 [1] : vector<16x8xf32> to vector<16xf32>
    %87 = vector.shape_cast %86 : vector<16xf32> to vector<16x1xf32>
    %cst_52 = arith.constant 1.000000e-24 : f32
    %88 = vector.broadcast %cst_52 : f32 to vector<16x1xf32>
    %89 = arith.maximumf %87, %88 : vector<16x1xf32>
    %90 = math.rsqrt %89 : vector<16x1xf32>
    %91 = vector.broadcast %90 : vector<16x1xf32> to vector<16x8xf32>
    %92 = arith.mulf %75, %91 : vector<16x8xf32>
    %c2 = arith.constant 2 : index
    %93 = memref.load %arg2[%c2] : memref<4xf32, #tpu.memory_space<smem>>
    %94 = vector.broadcast %93 : f32 to vector<16x8xf32>
    %95 = arith.mulf %84, %94 : vector<16x8xf32>
    %96 = arith.truncf %95 : vector<16x8xf32> to vector<16x8xbf16>
    %c0_53 = arith.constant 0 : index
    %c2_54 = arith.constant 2 : index
    %c0_55 = arith.constant 0 : index
    %c0_56 = arith.constant 0 : index
    %97 = vector.load %arg5[%c0_53, %c2_54, %c0_55, %c0_56] : memref<1x4x16x8xbf16, #tpu.memory_space<vmem>>, vector<1x1x16x8xbf16>
    %98 = vector.shape_cast %97 : vector<1x1x16x8xbf16> to vector<16x8xbf16>
    %99 = vector.shape_cast %96 : vector<16x8xbf16> to vector<1x1x16x8xbf16>
    tpu.vector_store %arg5[%c0_53, %c2_54, %c0_55, %c0_56], %99 {strides = array<i32>} : memref<1x4x16x8xbf16, #tpu.memory_space<vmem>>, vector<1x1x16x8xbf16>,
    %100 = arith.truncf %92 : vector<16x8xf32> to vector<16x8xbf16>
    %c0_57 = arith.constant 0 : index
    %c2_58 = arith.constant 2 : index
    %c0_59 = arith.constant 0 : index
    %c0_60 = arith.constant 0 : index
    %101 = vector.load %arg6[%c0_57, %c2_58, %c0_59, %c0_60] : memref<1x4x16x8xbf16, #tpu.memory_space<vmem>>, vector<1x1x16x8xbf16>
    %102 = vector.shape_cast %101 : vector<1x1x16x8xbf16> to vector<16x8xbf16>
    %103 = vector.shape_cast %100 : vector<16x8xbf16> to vector<1x1x16x8xbf16>
    tpu.vector_store %arg6[%c0_57, %c2_58, %c0_59, %c0_60], %103 {strides = array<i32>} : memref<1x4x16x8xbf16, #tpu.memory_space<vmem>>, vector<1x1x16x8xbf16>,
    %104 = arith.truncf %76 : vector<16x8xf32> to vector<16x8xbf16>
    %c0_61 = arith.constant 0 : index
    %c2_62 = arith.constant 2 : index
    %c0_63 = arith.constant 0 : index
    %c0_64 = arith.constant 0 : index
    %105 = vector.load %arg7[%c0_61, %c2_62, %c0_63, %c0_64] : memref<1x4x16x8xbf16, #tpu.memory_space<vmem>>, vector<1x1x16x8xbf16>
    %106 = vector.shape_cast %105 : vector<1x1x16x8xbf16> to vector<16x8xbf16>
    %107 = vector.shape_cast %104 : vector<16x8xbf16> to vector<1x1x16x8xbf16>
    tpu.vector_store %arg7[%c0_61, %c2_62, %c0_63, %c0_64], %107 {strides = array<i32>} : memref<1x4x16x8xbf16, #tpu.memory_space<vmem>>, vector<1x1x16x8xbf16>,
    %c0_65 = arith.constant 0 : index
    %c24 = arith.constant 24 : index
    %108 = vector.load %arg8[%c0_65, %c24] : memref<16x96xf32, #tpu.memory_space<vmem>>, vector<16x8xf32>
    %c0_66 = arith.constant 0 : index
    %c56 = arith.constant 56 : index
    %109 = vector.load %arg8[%c0_66, %c56] : memref<16x96xf32, #tpu.memory_space<vmem>>, vector<16x8xf32>
    %c0_67 = arith.constant 0 : index
    %c88 = arith.constant 88 : index
    %110 = vector.load %arg8[%c0_67, %c88] : memref<16x96xf32, #tpu.memory_space<vmem>>, vector<16x8xf32>
    %111 = arith.mulf %108, %108 : vector<16x8xf32>
    %cst_68 = arith.constant dense<0.000000e+00> : vector<16xf32>
    %112 = vector.multi_reduction <add>, %111, %cst_68 [1] : vector<16x8xf32> to vector<16xf32>
    %113 = vector.shape_cast %112 : vector<16xf32> to vector<16x1xf32>
    %cst_69 = arith.constant 1.000000e-24 : f32
    %114 = vector.broadcast %cst_69 : f32 to vector<16x1xf32>
    %115 = arith.maximumf %113, %114 : vector<16x1xf32>
    %116 = math.rsqrt %115 : vector<16x1xf32>
    %117 = vector.broadcast %116 : vector<16x1xf32> to vector<16x8xf32>
    %118 = arith.mulf %108, %117 : vector<16x8xf32>
    %119 = arith.mulf %109, %109 : vector<16x8xf32>
    %cst_70 = arith.constant dense<0.000000e+00> : vector<16xf32>
    %120 = vector.multi_reduction <add>, %119, %cst_70 [1] : vector<16x8xf32> to vector<16xf32>
    %121 = vector.shape_cast %120 : vector<16xf32> to vector<16x1xf32>
    %cst_71 = arith.constant 1.000000e-24 : f32
    %122 = vector.broadcast %cst_71 : f32 to vector<16x1xf32>
    %123 = arith.maximumf %121, %122 : vector<16x1xf32>
    %124 = math.rsqrt %123 : vector<16x1xf32>
    %125 = vector.broadcast %124 : vector<16x1xf32> to vector<16x8xf32>
    %126 = arith.mulf %109, %125 : vector<16x8xf32>
    %c3 = arith.constant 3 : index
    %127 = memref.load %arg2[%c3] : memref<4xf32, #tpu.memory_space<smem>>
    %128 = vector.broadcast %127 : f32 to vector<16x8xf32>
    %129 = arith.mulf %118, %128 : vector<16x8xf32>
    %130 = arith.truncf %129 : vector<16x8xf32> to vector<16x8xbf16>
    %c0_72 = arith.constant 0 : index
    %c3_73 = arith.constant 3 : index
    %c0_74 = arith.constant 0 : index
    %c0_75 = arith.constant 0 : index
    %131 = vector.load %arg5[%c0_72, %c3_73, %c0_74, %c0_75] : memref<1x4x16x8xbf16, #tpu.memory_space<vmem>>, vector<1x1x16x8xbf16>
    %132 = vector.shape_cast %131 : vector<1x1x16x8xbf16> to vector<16x8xbf16>
    %133 = vector.shape_cast %130 : vector<16x8xbf16> to vector<1x1x16x8xbf16>
    tpu.vector_store %arg5[%c0_72, %c3_73, %c0_74, %c0_75], %133 {strides = array<i32>} : memref<1x4x16x8xbf16, #tpu.memory_space<vmem>>, vector<1x1x16x8xbf16>,
    %134 = arith.truncf %126 : vector<16x8xf32> to vector<16x8xbf16>
    %c0_76 = arith.constant 0 : index
    %c3_77 = arith.constant 3 : index
    %c0_78 = arith.constant 0 : index
    %c0_79 = arith.constant 0 : index
    %135 = vector.load %arg6[%c0_76, %c3_77, %c0_78, %c0_79] : memref<1x4x16x8xbf16, #tpu.memory_space<vmem>>, vector<1x1x16x8xbf16>
    %136 = vector.shape_cast %135 : vector<1x1x16x8xbf16> to vector<16x8xbf16>
    %137 = vector.shape_cast %134 : vector<16x8xbf16> to vector<1x1x16x8xbf16>
    tpu.vector_store %arg6[%c0_76, %c3_77, %c0_78, %c0_79], %137 {strides = array<i32>} : memref<1x4x16x8xbf16, #tpu.memory_space<vmem>>, vector<1x1x16x8xbf16>,
    %138 = arith.truncf %110 : vector<16x8xf32> to vector<16x8xbf16>
    %c0_80 = arith.constant 0 : index
    %c3_81 = arith.constant 3 : index
    %c0_82 = arith.constant 0 : index
    %c0_83 = arith.constant 0 : index
    %139 = vector.load %arg7[%c0_80, %c3_81, %c0_82, %c0_83] : memref<1x4x16x8xbf16, #tpu.memory_space<vmem>>, vector<1x1x16x8xbf16>
    %140 = vector.shape_cast %139 : vector<1x1x16x8xbf16> to vector<16x8xbf16>
    %141 = vector.shape_cast %138 : vector<16x8xbf16> to vector<1x1x16x8xbf16>
    tpu.vector_store %arg7[%c0_80, %c3_81, %c0_82, %c0_83], %141 {strides = array<i32>} : memref<1x4x16x8xbf16, #tpu.memory_space<vmem>>, vector<1x1x16x8xbf16>,
    return
  }
  func.func @transform_0(%arg0: i32, %arg1: i32) -> i32 {
    %c0_i32 = arith.constant 0 : i32
    %c0_i32_0 = arith.constant 0 : i32
    return %c0_i32 : i32
  }
  func.func @transform_1(%arg0: i32, %arg1: i32) -> (i32, i32, i32) {
    %c0_i32 = arith.constant 0 : i32
    %c0_i32_0 = arith.constant 0 : i32
    return %arg0, %arg1, %c0_i32 : i32, i32, i32
  }
  func.func @transform_2(%arg0: i32, %arg1: i32) -> (i32, i32) {
    %c0_i32 = arith.constant 0 : i32
    %c0_i32_0 = arith.constant 0 : i32
    %c0_i32_1 = arith.constant 0 : i32
    return %c0_i32, %c0_i32_0 : i32, i32
  }
  func.func @transform_3(%arg0: i32, %arg1: i32) -> (i32, i32, i32, i32) {
    %c0_i32 = arith.constant 0 : i32
    %c0_i32_0 = arith.constant 0 : i32
    %c0_i32_1 = arith.constant 0 : i32
    return %arg0, %c0_i32, %arg1, %c0_i32_0 : i32, i32, i32, i32
  }
  func.func @transform_4(%arg0: i32, %arg1: i32) -> (i32, i32, i32, i32) {
    %c0_i32 = arith.constant 0 : i32
    %c0_i32_0 = arith.constant 0 : i32
    %c0_i32_1 = arith.constant 0 : i32
    return %arg0, %c0_i32, %arg1, %c0_i32_0 : i32, i32, i32, i32
  }
  func.func @transform_5(%arg0: i32, %arg1: i32) -> (i32, i32, i32, i32) {
    %c0_i32 = arith.constant 0 : i32
    %c0_i32_0 = arith.constant 0 : i32
    %c0_i32_1 = arith.constant 0 : i32
    return %arg0, %c0_i32, %arg1, %c0_i32_0 : i32, i32, i32, i32
  }
}

</mosaic_0001>

<llo_original>
// kernel: tpu_custom_call.1
$region0: #{tpu_custom_call.1}
  #allocation0 [shape = 'u32[]', space=smem, size = 0x4, offset = 0x4, fixed_abs, tag = 'smem constant byte address 0x4 - core index']
  #allocation1 [shape = 'u32[144,128]{1,0:T(1,128)}', space=vmem, size = 0x12000, scoped, tag = 'internal scratch']
  #allocation2 [shape = 'f32[16,96]{1,0:T(8,128)}', space=vmem, size = 0x2000, scoped, tag = 'scratch operand']
  %s0 = inlined_call_operand.hbm [shape: f32[4], index: 0, kind: input, shape index: {}]
  %s1 = inlined_call_operand.hbm [shape: f32[2,16,32], index: 1, kind: input, shape index: {}]
  %s2 = inlined_call_operand.hbm [shape: bf16[32,96], index: 2, kind: input, shape index: {}]
  %s3 = inlined_call_operand.vmem [shape: bf16[2,4,16,8], index: 3, kind: output, shape index: {0}]
  %s4 = inlined_call_operand.vmem [shape: bf16[2,4,16,8], index: 4, kind: output, shape index: {1}]
  %s5 = inlined_call_operand.vmem [shape: bf16[2,4,16,8], index: 5, kind: output, shape index: {2}]
  %6 = xla_tuple %s3, %s4, %s5
  %s7 = sld [smem:[#allocation0]]
  $region73: #{tpu_custom_call.1} parent=0
    _
  %s9 = ssub.s32 1, %s7
  %s10 = scalar_select 0, %s9, %s7
  $region1: #{tpu_custom_call.1} parent=0
    #allocation3 [shape = 'u8[512]{0}', space=smem, size = 0x200, scoped, tag = 'input window, operand 0, single buffered']
    #allocation4 [shape = 's32[2]{0}', space=sflag, size = 0x8, scoped, tag = 'scoped memory for tpu_custom_call.1']
    #allocation5 [shape = 's32[2]{0}', space=sflag, size = 0x8, scoped, tag = 'scoped memory for tpu_custom_call.1']
    #allocation6 [shape = 'u8[16384]{0}', space=vmem, size = 0x4000, scoped, tag = 'input window, operand 1']
    #allocation7 [shape = 'u8[8192]{0}', space=vmem, size = 0x2000, scoped, tag = 'input window, operand 2, single buffered']
    #allocation8 [shape = 's32[1]{0}', space=sflag, size = 0x4, scoped, tag = 'scoped memory for tpu_custom_call.1']
    %11 = vsyncpa [#allocation5], 0
    %12 = vsyncpa [#allocation4], 0
    %s13 = scalar_lea.sflag [#allocation4], 1
    %14 = vsyncpa %s13, 0
    %15 = vsyncpa [#allocation8], 0
    loop: start=0, step=1, limit=4
    $region2: #{tpu_custom_call.1} parent=1 // loop_pre_header
      _
    $region3: #{tpu_custom_call.1} parent=1 // loop_header
      %s17 = sphi 0, %s21
      %p18 = scmp.ge.s32.totalorder %s17, 4
      %s24 = sphi 0, %s36
      %s25 = sphi 0, %s32
      %s26 = sphi 0, %s24
      %s27 = sphi 0, %s25
      %s28 = sphi 0, %s26
      %s29 = sphi 0, %s27
      %s37 = sphi 0, %s37
      %s39 = sphi 0, %s37
      %s40 = sphi 0, %s39
      %s54 = sphi 0, %s40
      %s62 = sphi 0, %s64
      %s65 = sphi 0, %s62
      %s66 = sphi 0, %s65
      %s82 = sphi 0, %s66
      %s86 = sphi 0, %s86
      %s88 = sphi 0, %s86
      %s89 = sphi 0, %s88
      %s103 = sphi 0, %s89
      %s111 = sphi 0, %s113
      %s114 = sphi 0, %s111
      %s115 = sphi 0, %s114
      %s131 = sphi 0, %s115
      %s139 = sphi 0, %s141
      %s142 = sphi 0, %s139
      %s143 = sphi 0, %s142
      %s159 = sphi 0, %s143
      %s167 = sphi 0, %s169
      %s170 = sphi 0, %s167
      %s171 = sphi 0, %s170
      %s187 = sphi 0, %s171
    $region4: #{tpu_custom_call.1} parent=1 // loop_header_branch
      %20 = sbr.rel (%p18) target = $region8
    $region5: #{tpu_custom_call.1} parent=1 // loop_body
      %s22 = ssub.s32 %s17, 1
      %s23 = ssub.s32 %s17, 2
      %s30 = sadd.s32 1, %s25
      %p31 = scmp.ge.s32.totalorder %s30, 1
      %s32 = scalar_select %p31, 0, %s30
      %s33 = sadd.s32 1, %s24
      %s34 = scalar_select %p31, %s33, %s24
      %p35 = scmp.ge.s32.totalorder %s34, 2
      %s36 = scalar_select %p35, 0, %s34
      %s38 = sadd.s32 %s37, 1
      %p41 = scmp.eq.s32.totalorder %s17, 1
      %p42 = scmp.ne.s32.totalorder %s37, %s39
      %p43 = scmp.eq.s32.totalorder %s17, 0
      %p44 = por %p42, %p43
      %p45 = scmp.ne.s32.totalorder %s37, %s39
      %p46 = scmp.eq.s32.totalorder %s22, 1
      %p47 = por %p45, %p46
      %p48 = scmp.ne.s32.totalorder %s39, %s40
      %p49 = scmp.eq.s32.totalorder %s22, 0
      %p50 = por %p48, %p49
      %p51 = scmp.ne.s32.totalorder %s39, %s40
      %p52 = scmp.eq.s32.totalorder %s23, 1
      %p53 = por %p51, %p52
      %p55 = scmp.ne.s32.totalorder %s40, %s54
      %p56 = scmp.eq.s32.totalorder %s23, 0
      %p57 = por %p55, %p56
      %s58 = ssub.s32 %s24, %s36
      %s59 = ssub.s32 %s25, %s32
      %s60 = sor.u32 %s58, %s59
      %p61 = scmp.eq.s32.totalorder %s60, 0
      %s63 = sadd.s32 %s62, 1
      %s64 = scalar_select %p61, %s62, %s63
      %p67 = pneg %p61
      %p68 = scmp.eq.s32.totalorder %s17, 1
      %p69 = por %p67, %p68
      %p70 = scmp.ne.s32.totalorder %s62, %s65
      %p71 = scmp.eq.s32.totalorder %s17, 0
      %p72 = por %p70, %p71
      %p73 = scmp.ne.s32.totalorder %s62, %s65
      %p74 = scmp.eq.s32.totalorder %s22, 1
      %p75 = por %p73, %p74
      %p76 = scmp.ne.s32.totalorder %s65, %s66
      %p77 = scmp.eq.s32.totalorder %s22, 0
      %p78 = por %p76, %p77
      %p79 = scmp.ne.s32.totalorder %s65, %s66
      %p80 = scmp.eq.s32.totalorder %s23, 1
      %p81 = por %p79, %p80
      %p83 = scmp.ne.s32.totalorder %s66, %s82
      %p84 = scmp.eq.s32.totalorder %s23, 0
      %p85 = por %p83, %p84
      %s87 = sadd.s32 %s86, 1
      %p90 = scmp.eq.s32.totalorder %s17, 1
      %p91 = scmp.ne.s32.totalorder %s86, %s88
      %p92 = scmp.eq.s32.totalorder %s17, 0
      %p93 = por %p91, %p92
      %p94 = scmp.ne.s32.totalorder %s86, %s88
      %p95 = scmp.eq.s32.totalorder %s22, 1
      %p96 = por %p94, %p95
      %p97 = scmp.ne.s32.totalorder %s88, %s89
      %p98 = scmp.eq.s32.totalorder %s22, 0
      %p99 = por %p97, %p98
      %p100 = scmp.ne.s32.totalorder %s88, %s89
      %p101 = scmp.eq.s32.totalorder %s23, 1
      %p102 = por %p100, %p101
      %p104 = scmp.ne.s32.totalorder %s89, %s103
      %p105 = scmp.eq.s32.totalorder %s23, 0
      %p106 = por %p104, %p105
      %s107 = ssub.s32 %s24, %s36
      %s108 = ssub.s32 %s25, %s32
      %s109 = sor.u32 %s107, %s108
      %p110 = scmp.eq.s32.totalorder %s109, 0
      %s112 = sadd.s32 %s111, 1
      %s113 = scalar_select %p110, %s111, %s112
      %p116 = pneg %p110
      %p117 = scmp.eq.s32.totalorder %s17, 1
      %p118 = por %p116, %p117
      %p119 = scmp.ne.s32.totalorder %s111, %s114
      %p120 = scmp.eq.s32.totalorder %s17, 0
      %p121 = por %p119, %p120
      %p122 = scmp.ne.s32.totalorder %s111, %s114
      %p123 = scmp.eq.s32.totalorder %s22, 1
      %p124 = por %p122, %p123
      %p125 = scmp.ne.s32.totalorder %s114, %s115
      %p126 = scmp.eq.s32.totalorder %s22, 0
      %p127 = por %p125, %p126
      %p128 = scmp.ne.s32.totalorder %s114, %s115
      %p129 = scmp.eq.s32.totalorder %s23, 1
      %p130 = por %p128, %p129
      %p132 = scmp.ne.s32.totalorder %s115, %s131
      %p133 = scmp.eq.s32.totalorder %s23, 0
      %p134 = por %p132, %p133
      %s135 = ssub.s32 %s24, %s36
      %s136 = ssub.s32 %s25, %s32
      %s137 = sor.u32 %s135, %s136
      %p138 = scmp.eq.s32.totalorder %s137, 0
      %s140 = sadd.s32 %s139, 1
      %s141 = scalar_select %p138, %s139, %s140
      %p144 = pneg %p138
      %p145 = scmp.eq.s32.totalorder %s17, 1
      %p146 = por %p144, %p145
      %p147 = scmp.ne.s32.totalorder %s139, %s142
      %p148 = scmp.eq.s32.totalorder %s17, 0
      %p149 = por %p147, %p148
      %p150 = scmp.ne.s32.totalorder %s139, %s142
      %p151 = scmp.eq.s32.totalorder %s22, 1
      %p152 = por %p150, %p151
      %p153 = scmp.ne.s32.totalorder %s142, %s143
      %p154 = scmp.eq.s32.totalorder %s22, 0
      %p155 = por %p153, %p154
      %p156 = scmp.ne.s32.totalorder %s142, %s143
      %p157 = scmp.eq.s32.totalorder %s23, 1
      %p158 = por %p156, %p157
      %p160 = scmp.ne.s32.totalorder %s143, %s159
      %p161 = scmp.eq.s32.totalorder %s23, 0
      %p162 = por %p160, %p161
      %s163 = ssub.s32 %s24, %s36
      %s164 = ssub.s32 %s25, %s32
      %s165 = sor.u32 %s163, %s164
      %p166 = scmp.eq.s32.totalorder %s165, 0
      %s168 = sadd.s32 %s167, 1
      %s169 = scalar_select %p166, %s167, %s168
      %p172 = pneg %p166
      %p173 = scmp.eq.s32.totalorder %s17, 1
      %p174 = por %p172, %p173
      %p175 = scmp.ne.s32.totalorder %s167, %s170
      %p176 = scmp.eq.s32.totalorder %s17, 0
      %p177 = por %p175, %p176
      %p178 = scmp.ne.s32.totalorder %s167, %s170
      %p179 = scmp.eq.s32.totalorder %s22, 1
      %p180 = por %p178, %p179
      %p181 = scmp.ne.s32.totalorder %s170, %s171
      %p182 = scmp.eq.s32.totalorder %s22, 0
      %p183 = por %p181, %p182
      %p184 = scmp.ne.s32.totalorder %s170, %s171
      %p185 = scmp.eq.s32.totalorder %s23, 1
      %p186 = por %p184, %p185
      %p188 = scmp.ne.s32.totalorder %s171, %s187
      %p189 = scmp.eq.s32.totalorder %s23, 0
      %p190 = por %p188, %p189
      %p191 = scmp.le.s32.totalorder 1, %s17
      %p192 = scmp.lt.s32.totalorder %s17, 3
      %p193 = pnand %p191, %p192
      %p194 = pneg %p193
      // Predicated region
      $region9: #{tpu_custom_call.1} parent=5 // pred_check
        _
      $region10: #{tpu_custom_call.1} parent=5 // pred_check_branch
        %196 = sbr.rel (%p193) target = $region12
      $region11: #{tpu_custom_call.1} parent=5 // pred_region
        %s197 = ssub.s32 %s17, 1
        // Predicated region
        $region13: #{tpu_custom_call.1} parent=11 // pred_check
          %p198 = pneg %p50
        $region14: #{tpu_custom_call.1} parent=11 // pred_check_branch
          %200 = sbr.rel (%p198) target = $region16
        $region15: #{tpu_custom_call.1} parent=11 // pred_region
          %s202 = ssub.s32 16, 16
          %203 = vsyncadd [#allocation5], %s202
          %206 = dma.hbm_to_smem %s0, 16, [#allocation3], [#allocation5]
        $region16: #{tpu_custom_call.1} parent=11 // pred_fallthru
          _
        // Predicated region
        $region17: #{tpu_custom_call.1} parent=11 // pred_check
          %p207 = pneg %p99
        $region18: #{tpu_custom_call.1} parent=11 // pred_check_branch
          %209 = sbr.rel (%p207) target = $region20
        $region19: #{tpu_custom_call.1} parent=11 // pred_region
          %s211 = ssub.s32 256, 256
          %212 = vsyncadd [#allocation8], %s211
          %s213 = sshll.u32 [#allocation7], 4
          %s214 = int_to_ptr.vmem [resolvable:$true] %s213
          %219 = dma.hbm_to_vmem [thread:$0]  %s2, 256, %s214, [#allocation8], 64, 64, 4
        $region20: #{tpu_custom_call.1} parent=11 // pred_fallthru
          _
      $region12: #{tpu_custom_call.1} parent=5 // pred_fallthru
        _
      %p220 = scmp.lt.s32.totalorder %s17, 2
      // Predicated region
      $region21: #{tpu_custom_call.1} parent=5 // pred_check
        %p221 = pneg %p220
      $region22: #{tpu_custom_call.1} parent=5 // pred_check_branch
        %223 = sbr.rel (%p221) target = $region24
      $region23: #{tpu_custom_call.1} parent=5 // pred_region
        // Predicated region
        $region25: #{tpu_custom_call.1} parent=23 // pred_check
          %p224 = pneg %p72
        $region26: #{tpu_custom_call.1} parent=23 // pred_check_branch
          %226 = sbr.rel (%p224) target = $region28
        $region27: #{tpu_custom_call.1} parent=23 // pred_region
          %s227 = sand.u32 %s62, 1
          %s228 = scalar_lea.sflag [#allocation4], %s227
          %s229 = sand.u32 %s62, 1
          %s230 = smul.addr %s229, 16
          %s231 = scalar_lea.vmem [#allocation6], %s230
          %s232 = smul.u32 2, %s25
          %s234 = ssub.s32 256, 256
          %235 = vsyncadd %s228, %s234
          %s236 = smul.addr %s24, 2
          %s237 = sadd.s32 %s232, %s236
          %s238 = smul.addr %s237, 128
          %s239 = scalar_lea.hbm %s1, %s238
          %s240 = sshll.u32 %s231, 4
          %s241 = int_to_ptr.vmem [resolvable:$true] %s240
          %246 = dma.hbm_to_vmem [thread:$0]  %s239, 256, %s241, %s228, 128, 128, 8
        $region28: #{tpu_custom_call.1} parent=23 // pred_fallthru
          _
      $region24: #{tpu_custom_call.1} parent=5 // pred_fallthru
        _
      %p247 = scmp.le.s32.totalorder 1, %s17
      %p248 = scmp.lt.s32.totalorder %s17, 3
      %p249 = pnand %p247, %p248
      %p250 = pneg %p249
      // Predicated region
      $region29: #{tpu_custom_call.1} parent=5 // pred_check
        _
      $region30: #{tpu_custom_call.1} parent=5 // pred_check_branch
        %252 = sbr.rel (%p249) target = $region32
      $region31: #{tpu_custom_call.1} parent=5 // pred_region
        %s253 = ssub.s32 %s17, 1
        // Predicated region
        $region33: #{tpu_custom_call.1} parent=31 // pred_check
          %p254 = pneg %p50
        $region34: #{tpu_custom_call.1} parent=31 // pred_check_branch
          %256 = sbr.rel (%p254) target = $region36
        $region35: #{tpu_custom_call.1} parent=31 // pred_region
          %257 = dma.done [#allocation5], 16
        $region36: #{tpu_custom_call.1} parent=31 // pred_fallthru
          _
        %s258 = sand.u32 %s65, 1
        %s259 = scalar_lea.sflag [#allocation4], %s258
        %s260 = sand.u32 %s65, 1
        %s261 = smul.addr %s260, 16
        %s262 = scalar_lea.vmem [#allocation6], %s261
        // Predicated region
        $region37: #{tpu_custom_call.1} parent=31 // pred_check
          %p263 = pneg %p78
        $region38: #{tpu_custom_call.1} parent=31 // pred_check_branch
          %265 = sbr.rel (%p263) target = $region40
        $region39: #{tpu_custom_call.1} parent=31 // pred_region
          %266 = dma.done %s259, 256
        $region40: #{tpu_custom_call.1} parent=31 // pred_fallthru
          _
        // Predicated region
        $region41: #{tpu_custom_call.1} parent=31 // pred_check
          %p267 = pneg %p99
        $region42: #{tpu_custom_call.1} parent=31 // pred_check_branch
          %269 = sbr.rel (%p267) target = $region44
        $region43: #{tpu_custom_call.1} parent=31 // pred_region
          %270 = dma.done [#allocation8], 256
        $region44: #{tpu_custom_call.1} parent=31 // pred_fallthru
          _
        %271 = sfence
        %p272 = pneg %p50
        %p273 = pneg %p47
        %s274 = sand.u32 %s65, 1
        %s275 = scalar_lea.sflag [#allocation4], %s274
        %s276 = sand.u32 %s65, 1
        %s277 = smul.addr %s276, 16
        %s278 = scalar_lea.vmem [#allocation6], %s277
        %p279 = pneg %p78
        %p280 = pneg %p75
        %p281 = pneg %p99
        %p282 = pneg %p96
        %p283 = pneg %p127
        %p284 = pneg %p124
        %s285 = smul.u32 2, %s27
        %p286 = scmp.lt.s32.totalorder %s26, 1
        %s287 = scalar_select %p286, %s26, 1
        %p288 = scmp.lt.s32.totalorder %s285, 1
        %s289 = scalar_select %p288, %s285, 1
        %s290 = smul.addr %s287, 8
        %s291 = sadd.s32 %s289, %s290
        %s292 = smul.addr %s291, 4
        %s293 = scalar_lea.vmem %s3, %s292
        %p294 = pneg %p155
        %p295 = pneg %p152
        %s296 = smul.u32 2, %s27
        %p297 = scmp.lt.s32.totalorder %s26, 1
        %s298 = scalar_select %p297, %s26, 1
        %p299 = scmp.lt.s32.totalorder %s296, 1
        %s300 = scalar_select %p299, %s296, 1
        %s301 = smul.addr %s298, 8
        %s302 = sadd.s32 %s300, %s301
        %s303 = smul.addr %s302, 4
        %s304 = scalar_lea.vmem %s4, %s303
        %p305 = pneg %p183
        %p306 = pneg %p180
        %s307 = smul.u32 2, %s27
        %p308 = scmp.lt.s32.totalorder %s26, 1
        %s309 = scalar_select %p308, %s26, 1
        %p310 = scmp.lt.s32.totalorder %s307, 1
        %s311 = scalar_select %p310, %s307, 1
        %s312 = smul.addr %s309, 8
        %s313 = sadd.s32 %s311, %s312
        %s314 = smul.addr %s313, 4
        %s315 = scalar_lea.vmem %s5, %s314
        %s316 = smul.u32 2, %s27
        %s317 = smul.u32 2, %s27
        %p318 = scmp.lt.s32.totalorder %s26, 1
        %s319 = scalar_select %p318, %s26, 1
        %p320 = scmp.lt.s32.totalorder %s317, 1
        %s321 = scalar_select %p320, %s317, 1
        %s322 = smul.addr %s319, 8
        %s323 = sadd.s32 %s321, %s322
        %s324 = smul.addr %s323, 4
        %s325 = scalar_lea.vmem %s3, %s324
        %s326 = smul.u32 2, %s27
        %s327 = smul.u32 2, %s27
        %p328 = scmp.lt.s32.totalorder %s26, 1
        %s329 = scalar_select %p328, %s26, 1
        %p330 = scmp.lt.s32.totalorder %s327, 1
        %s331 = scalar_select %p330, %s327, 1
        %s332 = smul.addr %s329, 8
        %s333 = sadd.s32 %s331, %s332
        %s334 = smul.addr %s333, 4
        %s335 = scalar_lea.vmem %s4, %s334
        %s336 = smul.u32 2, %s27
        %s337 = smul.u32 2, %s27
        %p338 = scmp.lt.s32.totalorder %s26, 1
        %s339 = scalar_select %p338, %s26, 1
        %p340 = scmp.lt.s32.totalorder %s337, 1
        %s341 = scalar_select %p340, %s337, 1
        %s342 = smul.addr %s339, 8
        %s343 = sadd.s32 %s341, %s342
        %s344 = smul.addr %s343, 4
        %s345 = scalar_lea.vmem %s5, %s344
        %s346 = smul.u32 2, %s27
        %v348 = vld [vmem:[%s262] sm:$0xff]
        %v349 = vld [vmem:[%s262 + $0x8] sm:$0xff]
        %v350 = vpack.c.bf16 %v349, %v348
        %v351 = vld [vmem:[#allocation7] sm:$0xf]
        %v352 = vld [vmem:[#allocation7 + $0x4] sm:$0xf]
        %v353 = vld [vmem:[#allocation7 + $0x8] sm:$0xf]
        %v354 = vld [vmem:[#allocation7 + $0xc] sm:$0xf]
        %v359 = vunpack.c.l.b16 %v351
        %v360 = vunpack.c.l.b16 %v352
        %v361 = vunpack.c.l.b16 %v353
        %v362 = vunpack.c.l.b16 %v354
        %v363 = vpack.c.b16 %v360, %v359
        %v364 = vpack.c.b16 %v362, %v361
        %vm367 = vcmask 261120
        %v369 = vsel %vm367, %v350, 0
        %371 = vmatprep.subr.bf16.mxu0 0
        %372 = vmatpush1.bf16.msra.mxu0 0
        %373 = vmatprep.subr.bf16.mxu0 0
        %374 = vmatpush1.bf16.msra.mxu0 0
        %375 = vmatprep.subr.bf16.mxu0 0
        %376 = vmatpush1.bf16.msra.mxu0 0
        %377 = vmatprep.subr.bf16.mxu0 0
        %378 = vmatpush1.bf16.msra.mxu0 0
        %379 = vmatprep.subr.bf16.mxu0 0
        %380 = vmatpush1.bf16.msra.mxu0 0
        %381 = vmatprep.subr.bf16.mxu0 0
        %382 = vmatpush1.bf16.msra.mxu0 0
        %383 = vmatprep.subr.bf16.mxu0 0
        %384 = vmatpush1.bf16.msra.mxu0 %v364
        %385 = vmatprep.subr.bf16.mxu0 0
        %386 = vmatpush1.bf16.msra.mxu0 %v363
        %387 = vmatprep.subr.bf16.mxu0 0
        %388 = vmatpush2.bf16.msra.mxu0 0
        %389 = vmatprep.subr.bf16.mxu0 0
        %390 = vmatpush2.bf16.msra.mxu0 0
        %391 = vmatprep.subr.bf16.mxu0 0
        %392 = vmatpush2.bf16.msra.mxu0 0
        %393 = vmatprep.subr.bf16.mxu0 0
        %394 = vmatpush2.bf16.msra.mxu0 0
        %395 = vmatprep.subr.bf16.mxu0 0
        %396 = vmatpush2.bf16.msra.mxu0 0
        %397 = vmatprep.subr.bf16.mxu0 0
        %398 = vmatpush2.bf16.msra.mxu0 0
        %399 = vmatprep.subr.bf16.mxu0 0
        %400 = vmatpush2.bf16.msra.mxu0 0
        %401 = vmatprep.subr.bf16.mxu0 0
        %402 = vmatpush2.bf16.msra.mxu0 0
        %403 = vmatprep.mubr.bf16.mxu0 0
        %404 = vmatmul.mubr.bf16.gmra.mxu0 %v369
        %v405 = vpop.f32.mrf.mxu0
        %v406 = vadd.f32 0.0, %v405
        %v407 = vpop.f32.mrf.mxu0
        %v408 = vpop.f32.mrf.mxu0
        %v409 = vadd.f32 0.0, %v408
        %v410 = vpop.f32.mrf.mxu0
        %411 = vdwg.mxu0
        %vm412 = vcmask 785408
        %413 = vst.msk [vmem:[#allocation2] sm:$0xff] %vm412, %v406
        %414 = vst.msk [vmem:[#allocation2 + $0x8] sm:$0xff] %vm412, %v409
        %v415 = vld [vmem:[#allocation2] sm:$0xff]
        %v416 = vld [vmem:[#allocation2 + $0x8] sm:$0xff]
        %v417 = vmul.f32 %v415, %v415
        %v418 = vmul.f32 %v416, %v416
        %vm419 = vcmask 64512
        %v420 = vsel %vm419, %v417, 0.0
        %421 = vadd.xlane.f32.xlu0 %v420
        %v422 = vpop.xlane.xlu0 %421
        %v423 = vsel %vm419, %v418, 0.0
        %424 = vadd.xlane.f32.xlu0 %v423
        %v425 = vpop.xlane.xlu0 %424
        %v426 = vmax.f32 %v422, 1e-24
        %v427 = vmax.f32 %v425, 1e-24
        %v428 = vrsqrt.pop %v426
        %v429 = vrsqrt.pop %v427
        %v430 = vmul.f32 %v415, %v428
        %v431 = vmul.f32 %v416, %v429
        %434 = vrot.lane.b32.xlu0 %v417, 96
        %v435 = vpop.permute.xlu0 %434
        %436 = vrot.lane.b32.xlu0 %v418, 96
        %v437 = vpop.permute.xlu0 %436
        %v440 = vsel %vm419, %v435, 0.0
        %441 = vadd.xlane.f32.xlu0 %v440
        %v442 = vpop.xlane.xlu0 %441
        %v443 = vsel %vm419, %v437, 0.0
        %444 = vadd.xlane.f32.xlu0 %v443
        %v445 = vpop.xlane.xlu0 %444
        %v446 = vmax.f32 %v442, 1e-24
        %v447 = vmax.f32 %v445, 1e-24
        %v448 = vrsqrt.pop %v446
        %v449 = vrsqrt.pop %v447
        %v450 = vmul.f32 %v415, %v448
        %v451 = vmul.f32 %v416, %v449
        %s452 = sld [smem:[#allocation3]]
        %v453 = vstv %s452
        %v454 = vmul.f32 %v430, %v453
        %v455 = vmul.f32 %v431, %v453
        %v456 = vpack.c.bf16 %v455, %v454
        %v458 = vunpack.c.l.b16 %v456
        %v459 = vunpack.c.h.b16 %v456
        %v460 = vpack.c.b16 %v458, %v458
        %v461 = vpack.c.b16 %v459, %v459
        %vm464 = vcmask 60416
        %465 = vst.msk [vmem:[%s325] sm:$0xf] %vm464, %v460
        %466 = vst.msk [vmem:[%s325 + $0x4] sm:$0xf] %vm464, %v461
        %v467 = vpack.c.bf16 %v451, %v450
        %v469 = vunpack.c.l.b16 %v467
        %v470 = vunpack.c.h.b16 %v467
        %v471 = vpack.c.b16 %v469, %v469
        %v472 = vpack.c.b16 %v470, %v470
        %473 = vrot.lane.b32.xlu0 %v471, 96
        %v474 = vpop.permute.xlu0 %473
        %475 = vrot.lane.b32.xlu0 %v472, 96
        %v476 = vpop.permute.xlu0 %475
        %479 = vst.msk [vmem:[%s335] sm:$0xf] %vm464, %v474
        %480 = vst.msk [vmem:[%s335 + $0x4] sm:$0xf] %vm464, %v476
        %v481 = vpack.c.bf16 %v416, %v415
        %v483 = vunpack.c.l.b16 %v481
        %v484 = vunpack.c.h.b16 %v481
        %v485 = vpack.c.b16 %v483, %v483
        %v486 = vpack.c.b16 %v484, %v484
        %487 = vrot.lane.b32.xlu0 %v485, 64
        %v488 = vpop.permute.xlu0 %487
        %489 = vrot.lane.b32.xlu0 %v486, 64
        %v490 = vpop.permute.xlu0 %489
        %493 = vst.msk [vmem:[%s345] sm:$0xf] %vm464, %v488
        %494 = vst.msk [vmem:[%s345 + $0x4] sm:$0xf] %vm464, %v490
        %v495 = vld [vmem:[#allocation2] sm:$0xff]
        %v496 = vld [vmem:[#allocation2 + $0x8] sm:$0xff]
        %v497 = vmul.f32 %v495, %v495
        %v498 = vmul.f32 %v496, %v496
        %501 = vrot.lane.b32.xlu0 %v497, 120
        %v502 = vpop.permute.xlu0 %501
        %503 = vrot.lane.b32.xlu0 %v498, 120
        %v504 = vpop.permute.xlu0 %503
        %v507 = vsel %vm419, %v502, 0.0
        %508 = vadd.xlane.f32.xlu0 %v507
        %v509 = vpop.xlane.xlu0 %508
        %v510 = vsel %vm419, %v504, 0.0
        %511 = vadd.xlane.f32.xlu0 %v510
        %v512 = vpop.xlane.xlu0 %511
        %v513 = vmax.f32 %v509, 1e-24
        %v514 = vmax.f32 %v512, 1e-24
        %v515 = vrsqrt.pop %v513
        %v516 = vrsqrt.pop %v514
        %v517 = vmul.f32 %v495, %v515
        %v518 = vmul.f32 %v496, %v516
        %519 = vrot.lane.b32.xlu0 %v497, 88
        %v520 = vpop.permute.xlu0 %519
        %521 = vrot.lane.b32.xlu0 %v498, 88
        %v522 = vpop.permute.xlu0 %521
        %v525 = vsel %vm419, %v520, 0.0
        %526 = vadd.xlane.f32.xlu0 %v525
        %v527 = vpop.xlane.xlu0 %526
        %v528 = vsel %vm419, %v522, 0.0
        %529 = vadd.xlane.f32.xlu0 %v528
        %v530 = vpop.xlane.xlu0 %529
        %v531 = vmax.f32 %v527, 1e-24
        %v532 = vmax.f32 %v530, 1e-24
        %v533 = vrsqrt.pop %v531
        %v534 = vrsqrt.pop %v532
        %v535 = vmul.f32 %v495, %v533
        %v536 = vmul.f32 %v496, %v534
        %s537 = sld [smem:[#allocation3 + $0x1]]
        %v538 = vstv %s537
        %v539 = vmul.f32 %v517, %v538
        %v540 = vmul.f32 %v518, %v538
        %v541 = vpack.c.bf16 %v540, %v539
        %v543 = vunpack.c.l.b16 %v541
        %v544 = vunpack.c.h.b16 %v541
        %v545 = vpack.c.b16 %v543, %v543
        %v546 = vpack.c.b16 %v544, %v544
        %547 = vrot.lane.b32.xlu0 %v545, 120
        %v548 = vpop.permute.xlu0 %547
        %549 = vrot.lane.b32.xlu0 %v546, 120
        %v550 = vpop.permute.xlu0 %549
        %s553 = scalar_lea.vmem %s325, 8
        %554 = vst.msk [vmem:[%s553] sm:$0xf] %vm464, %v548
        %555 = vst.msk [vmem:[%s553 + $0x4] sm:$0xf] %vm464, %v550
        %v556 = vpack.c.bf16 %v536, %v535
        %v558 = vunpack.c.l.b16 %v556
        %v559 = vunpack.c.h.b16 %v556
        %v560 = vpack.c.b16 %v558, %v558
        %v561 = vpack.c.b16 %v559, %v559
        %562 = vrot.lane.b32.xlu0 %v560, 88
        %v563 = vpop.permute.xlu0 %562
        %564 = vrot.lane.b32.xlu0 %v561, 88
        %v565 = vpop.permute.xlu0 %564
        %s568 = scalar_lea.vmem %s335, 8
        %569 = vst.msk [vmem:[%s568] sm:$0xf] %vm464, %v563
        %570 = vst.msk [vmem:[%s568 + $0x4] sm:$0xf] %vm464, %v565
        %v571 = vpack.c.bf16 %v496, %v495
        %v573 = vunpack.c.l.b16 %v571
        %v574 = vunpack.c.h.b16 %v571
        %v575 = vpack.c.b16 %v573, %v573
        %v576 = vpack.c.b16 %v574, %v574
        %577 = vrot.lane.b32.xlu0 %v575, 56
        %v578 = vpop.permute.xlu0 %577
        %579 = vrot.lane.b32.xlu0 %v576, 56
        %v580 = vpop.permute.xlu0 %579
        %s583 = scalar_lea.vmem %s345, 8
        %584 = vst.msk [vmem:[%s583] sm:$0xf] %vm464, %v578
        %585 = vst.msk [vmem:[%s583 + $0x4] sm:$0xf] %vm464, %v580
        %v586 = vld [vmem:[#allocation2] sm:$0xff]
        %v587 = vld [vmem:[#allocation2 + $0x8] sm:$0xff]
        %v588 = vmul.f32 %v586, %v586
        %v589 = vmul.f32 %v587, %v587
        %592 = vrot.lane.b32.xlu0 %v588, 112
        %v593 = vpop.permute.xlu0 %592
        %594 = vrot.lane.b32.xlu0 %v589, 112
        %v595 = vpop.permute.xlu0 %594
        %v598 = vsel %vm419, %v593, 0.0
        %599 = vadd.xlane.f32.xlu0 %v598
        %v600 = vpop.xlane.xlu0 %599
        %v601 = vsel %vm419, %v595, 0.0
        %602 = vadd.xlane.f32.xlu0 %v601
        %v603 = vpop.xlane.xlu0 %602
        %v604 = vmax.f32 %v600, 1e-24
        %v605 = vmax.f32 %v603, 1e-24
        %v606 = vrsqrt.pop %v604
        %v607 = vrsqrt.pop %v605
        %v608 = vmul.f32 %v586, %v606
        %v609 = vmul.f32 %v587, %v607
        %610 = vrot.lane.b32.xlu0 %v588, 80
        %v611 = vpop.permute.xlu0 %610
        %612 = vrot.lane.b32.xlu0 %v589, 80
        %v613 = vpop.permute.xlu0 %612
        %v616 = vsel %vm419, %v611, 0.0
        %617 = vadd.xlane.f32.xlu0 %v616
        %v618 = vpop.xlane.xlu0 %617
        %v619 = vsel %vm419, %v613, 0.0
        %620 = vadd.xlane.f32.xlu0 %v619
        %v621 = vpop.xlane.xlu0 %620
        %v622 = vmax.f32 %v618, 1e-24
        %v623 = vmax.f32 %v621, 1e-24
        %v624 = vrsqrt.pop %v622
        %v625 = vrsqrt.pop %v623
        %v626 = vmul.f32 %v586, %v624
        %v627 = vmul.f32 %v587, %v625
        %s628 = sld [smem:[#allocation3 + $0x2]]
        %v629 = vstv %s628
        %v630 = vmul.f32 %v608, %v629
        %v631 = vmul.f32 %v609, %v629
        %v632 = vpack.c.bf16 %v631, %v630
        %v634 = vunpack.c.l.b16 %v632
        %v635 = vunpack.c.h.b16 %v632
        %v636 = vpack.c.b16 %v634, %v634
        %v637 = vpack.c.b16 %v635, %v635
        %638 = vrot.lane.b32.xlu0 %v636, 112
        %v639 = vpop.permute.xlu0 %638
        %640 = vrot.lane.b32.xlu0 %v637, 112
        %v641 = vpop.permute.xlu0 %640
        %s644 = scalar_lea.vmem %s325, 16
        %645 = vst.msk [vmem:[%s644] sm:$0xf] %vm464, %v639
        %646 = vst.msk [vmem:[%s644 + $0x4] sm:$0xf] %vm464, %v641
        %v647 = vpack.c.bf16 %v627, %v626
        %v649 = vunpack.c.l.b16 %v647
        %v650 = vunpack.c.h.b16 %v647
        %v651 = vpack.c.b16 %v649, %v649
        %v652 = vpack.c.b16 %v650, %v650
        %653 = vrot.lane.b32.xlu0 %v651, 80
        %v654 = vpop.permute.xlu0 %653
        %655 = vrot.lane.b32.xlu0 %v652, 80
        %v656 = vpop.permute.xlu0 %655
        %s659 = scalar_lea.vmem %s335, 16
        %660 = vst.msk [vmem:[%s659] sm:$0xf] %vm464, %v654
        %661 = vst.msk [vmem:[%s659 + $0x4] sm:$0xf] %vm464, %v656
        %v662 = vpack.c.bf16 %v587, %v586
        %v664 = vunpack.c.l.b16 %v662
        %v665 = vunpack.c.h.b16 %v662
        %v666 = vpack.c.b16 %v664, %v664
        %v667 = vpack.c.b16 %v665, %v665
        %668 = vrot.lane.b32.xlu0 %v666, 48
        %v669 = vpop.permute.xlu0 %668
        %670 = vrot.lane.b32.xlu0 %v667, 48
        %v671 = vpop.permute.xlu0 %670
        %s674 = scalar_lea.vmem %s345, 16
        %675 = vst.msk [vmem:[%s674] sm:$0xf] %vm464, %v669
        %676 = vst.msk [vmem:[%s674 + $0x4] sm:$0xf] %vm464, %v671
        %v677 = vld [vmem:[#allocation2] sm:$0xff]
        %v678 = vld [vmem:[#allocation2 + $0x8] sm:$0xff]
        %v679 = vmul.f32 %v677, %v677
        %v680 = vmul.f32 %v678, %v678
        %683 = vrot.lane.b32.xlu0 %v679, 104
        %v684 = vpop.permute.xlu0 %683
        %685 = vrot.lane.b32.xlu0 %v680, 104
        %v686 = vpop.permute.xlu0 %685
        %v689 = vsel %vm419, %v684, 0.0
        %690 = vadd.xlane.f32.xlu0 %v689
        %v691 = vpop.xlane.xlu0 %690
        %v692 = vsel %vm419, %v686, 0.0
        %693 = vadd.xlane.f32.xlu0 %v692
        %v694 = vpop.xlane.xlu0 %693
        %v695 = vmax.f32 %v691, 1e-24
        %v696 = vmax.f32 %v694, 1e-24
        %v697 = vrsqrt.pop %v695
        %v698 = vrsqrt.pop %v696
        %v699 = vmul.f32 %v677, %v697
        %v700 = vmul.f32 %v678, %v698
        %701 = vrot.lane.b32.xlu0 %v679, 72
        %v702 = vpop.permute.xlu0 %701
        %703 = vrot.lane.b32.xlu0 %v680, 72
        %v704 = vpop.permute.xlu0 %703
        %v707 = vsel %vm419, %v702, 0.0
        %708 = vadd.xlane.f32.xlu0 %v707
        %v709 = vpop.xlane.xlu0 %708
        %v710 = vsel %vm419, %v704, 0.0
        %711 = vadd.xlane.f32.xlu0 %v710
        %v712 = vpop.xlane.xlu0 %711
        %v713 = vmax.f32 %v709, 1e-24
        %v714 = vmax.f32 %v712, 1e-24
        %v715 = vrsqrt.pop %v713
        %v716 = vrsqrt.pop %v714
        %v717 = vmul.f32 %v677, %v715
        %v718 = vmul.f32 %v678, %v716
        %s719 = sld [smem:[#allocation3 + $0x3]]
        %v720 = vstv %s719
        %v721 = vmul.f32 %v699, %v720
        %v722 = vmul.f32 %v700, %v720
        %v723 = vpack.c.bf16 %v722, %v721
        %v725 = vunpack.c.l.b16 %v723
        %v726 = vunpack.c.h.b16 %v723
        %v727 = vpack.c.b16 %v725, %v725
        %v728 = vpack.c.b16 %v726, %v726
        %729 = vrot.lane.b32.xlu0 %v727, 104
        %v730 = vpop.permute.xlu0 %729
        %731 = vrot.lane.b32.xlu0 %v728, 104
        %v732 = vpop.permute.xlu0 %731
        %s735 = scalar_lea.vmem %s325, 24
        %736 = vst.msk [vmem:[%s735] sm:$0xf] %vm464, %v730
        %737 = vst.msk [vmem:[%s735 + $0x4] sm:$0xf] %vm464, %v732
        %v738 = vpack.c.bf16 %v718, %v717
        %v740 = vunpack.c.l.b16 %v738
        %v741 = vunpack.c.h.b16 %v738
        %v742 = vpack.c.b16 %v740, %v740
        %v743 = vpack.c.b16 %v741, %v741
        %744 = vrot.lane.b32.xlu0 %v742, 72
        %v745 = vpop.permute.xlu0 %744
        %746 = vrot.lane.b32.xlu0 %v743, 72
        %v747 = vpop.permute.xlu0 %746
        %s750 = scalar_lea.vmem %s335, 24
        %751 = vst.msk [vmem:[%s750] sm:$0xf] %vm464, %v745
        %752 = vst.msk [vmem:[%s750 + $0x4] sm:$0xf] %vm464, %v747
        %v753 = vpack.c.bf16 %v678, %v677
        %v755 = vunpack.c.l.b16 %v753
        %v756 = vunpack.c.h.b16 %v753
        %v757 = vpack.c.b16 %v755, %v755
        %v758 = vpack.c.b16 %v756, %v756
        %759 = vrot.lane.b32.xlu0 %v757, 40
        %v760 = vpop.permute.xlu0 %759
        %761 = vrot.lane.b32.xlu0 %v758, 40
        %v762 = vpop.permute.xlu0 %761
        %s765 = scalar_lea.vmem %s345, 24
        %766 = vst.msk [vmem:[%s765] sm:$0xf] %vm464, %v760
        %767 = vst.msk [vmem:[%s765 + $0x4] sm:$0xf] %vm464, %v762
        %s768 = smul.u32 2, %s27
        %p769 = scmp.lt.s32.totalorder %s26, 1
        %s770 = scalar_select %p769, %s26, 1
        %p771 = scmp.lt.s32.totalorder %s768, 1
        %s772 = scalar_select %p771, %s768, 1
        %s773 = smul.addr %s770, 8
        %s774 = sadd.s32 %s772, %s773
        %s775 = smul.addr %s774, 4
        %s776 = scalar_lea.vmem %s3, %s775
        %s777 = smul.u32 2, %s27
        %p778 = scmp.lt.s32.totalorder %s26, 1
        %s779 = scalar_select %p778, %s26, 1
        %p780 = scmp.lt.s32.totalorder %s777, 1
        %s781 = scalar_select %p780, %s777, 1
        %s782 = smul.addr %s779, 8
        %s783 = sadd.s32 %s781, %s782
        %s784 = smul.addr %s783, 4
        %s785 = scalar_lea.vmem %s4, %s784
        %s786 = smul.u32 2, %s27
        %p787 = scmp.lt.s32.totalorder %s26, 1
        %s788 = scalar_select %p787, %s26, 1
        %p789 = scmp.lt.s32.totalorder %s786, 1
        %s790 = scalar_select %p789, %s786, 1
        %s791 = smul.addr %s788, 8
        %s792 = sadd.s32 %s790, %s791
        %s793 = smul.addr %s792, 4
        %s794 = scalar_lea.vmem %s5, %s793
        // Predicated region
        $region45: #{tpu_custom_call.1} parent=31 // pred_check
          %p795 = pneg %p124
        $region46: #{tpu_custom_call.1} parent=31 // pred_check_branch
          %797 = sbr.rel (%p795) target = $region48
        $region47: #{tpu_custom_call.1} parent=31 // pred_region
          %s798 = smul.u32 2, %s27
        $region48: #{tpu_custom_call.1} parent=31 // pred_fallthru
          _
        // Predicated region
        $region49: #{tpu_custom_call.1} parent=31 // pred_check
          %p799 = pneg %p152
        $region50: #{tpu_custom_call.1} parent=31 // pred_check_branch
          %801 = sbr.rel (%p799) target = $region52
        $region51: #{tpu_custom_call.1} parent=31 // pred_region
          %s802 = smul.u32 2, %s27
        $region52: #{tpu_custom_call.1} parent=31 // pred_fallthru
          _
        // Predicated region
        $region53: #{tpu_custom_call.1} parent=31 // pred_check
          %p803 = pneg %p180
        $region54: #{tpu_custom_call.1} parent=31 // pred_check_branch
          %805 = sbr.rel (%p803) target = $region56
        $region55: #{tpu_custom_call.1} parent=31 // pred_region
          %s806 = smul.u32 2, %s27
        $region56: #{tpu_custom_call.1} parent=31 // pred_fallthru
          _
      $region32: #{tpu_custom_call.1} parent=5 // pred_fallthru
        _
      %p807 = scmp.le.s32.totalorder 2, %s17
      // Predicated region
      $region57: #{tpu_custom_call.1} parent=5 // pred_check
        %p808 = pneg %p807
      $region58: #{tpu_custom_call.1} parent=5 // pred_check_branch
        %810 = sbr.rel (%p808) target = $region60
      $region59: #{tpu_custom_call.1} parent=5 // pred_region
        %s811 = ssub.s32 %s17, 2
        // Predicated region
        $region61: #{tpu_custom_call.1} parent=59 // pred_check
          %p812 = pneg %p130
        $region62: #{tpu_custom_call.1} parent=59 // pred_check_branch
          %814 = sbr.rel (%p812) target = $region64
        $region63: #{tpu_custom_call.1} parent=59 // pred_region
          %s815 = smul.u32 2, %s29
          %p816 = scmp.lt.s32.totalorder %s28, 1
          %s817 = scalar_select %p816, %s28, 1
          %p818 = scmp.lt.s32.totalorder %s815, 1
          %s819 = scalar_select %p818, %s815, 1
          %s820 = smul.addr %s817, 8
          %s821 = sadd.s32 %s819, %s820
          %s822 = smul.addr %s821, 4
          %s823 = scalar_lea.vmem %s3, %s822
        $region64: #{tpu_custom_call.1} parent=59 // pred_fallthru
          _
        // Predicated region
        $region65: #{tpu_custom_call.1} parent=59 // pred_check
          %p824 = pneg %p158
        $region66: #{tpu_custom_call.1} parent=59 // pred_check_branch
          %826 = sbr.rel (%p824) target = $region68
        $region67: #{tpu_custom_call.1} parent=59 // pred_region
          %s827 = smul.u32 2, %s29
          %p828 = scmp.lt.s32.totalorder %s28, 1
          %s829 = scalar_select %p828, %s28, 1
          %p830 = scmp.lt.s32.totalorder %s827, 1
          %s831 = scalar_select %p830, %s827, 1
          %s832 = smul.addr %s829, 8
          %s833 = sadd.s32 %s831, %s832
          %s834 = smul.addr %s833, 4
          %s835 = scalar_lea.vmem %s4, %s834
        $region68: #{tpu_custom_call.1} parent=59 // pred_fallthru
          _
        // Predicated region
        $region69: #{tpu_custom_call.1} parent=59 // pred_check
          %p836 = pneg %p186
        $region70: #{tpu_custom_call.1} parent=59 // pred_check_branch
          %838 = sbr.rel (%p836) target = $region72
        $region71: #{tpu_custom_call.1} parent=59 // pred_region
          %s839 = smul.u32 2, %s29
          %p840 = scmp.lt.s32.totalorder %s28, 1
          %s841 = scalar_select %p840, %s28, 1
          %p842 = scmp.lt.s32.totalorder %s839, 1
          %s843 = scalar_select %p842, %s839, 1
          %s844 = smul.addr %s841, 8
          %s845 = sadd.s32 %s843, %s844
          %s846 = smul.addr %s845, 4
          %s847 = scalar_lea.vmem %s5, %s846
        $region72: #{tpu_custom_call.1} parent=59 // pred_fallthru
          _
      $region60: #{tpu_custom_call.1} parent=5 // pred_fallthru
        _
    $region6: #{tpu_custom_call.1} parent=1 // loop_footer
      %s21 = sadd.s32 1, %s17
    $region7: #{tpu_custom_call.1} parent=1 // loop_footer_branch
      %16 = sbr.rel target = $region3
    $region8: #{tpu_custom_call.1} parent=1 // loop_exit
      _
    %848 = vsyncpa [#allocation4], 1
    %s849 = scalar_lea.sflag [#allocation4], 1
    %850 = vsyncpa %s849, 1
    %851 = vsyncpa [#allocation8], 1
    %852 = vsyncpa [#allocation5], 1
    %s853 = scalar_lea.sflag [#allocation5], 1
    %854 = vsyncpa %s853, 1

</llo_original>
